<compile_context>
chip_gen: v6e
topology: v6e:2x2x1
jax: 0.10.0
libtpu: 0.0.40
codegen_flags: <defaults>
</compile_context>

<pallas_src>
import jax
import jax.numpy as jnp
from jax.experimental import pallas as pl
from jax.experimental.pallas import tpu as pltpu


# --------------------------------------------------------------------------- #
# Kernel
# --------------------------------------------------------------------------- #
def critic_kernel(x_ref, w1_ref, b1_ref, w2_ref, b2_ref, w3_ref, b3_ref, o_ref):
    x = x_ref[...]                        # (4, tb)   fc1 dtype (f32 or bf16)
    w1 = w1_ref[...]                      # (256, 4)  fc1 dtype

    # ---- fc1: K=4 is far too small for the MXU -> 4 broadcast FMAs (VPU). ----
    # Feature-major: h1 is (256, tb), so every intermediate stays lane-dense.
    h1 = b1_ref[...] + w1[:, 0:1] * x[0:1, :]
    for k in range(1, 4):                                   # static unroll
        h1 = h1 + w1[:, k:k + 1] * x[k:k + 1, :]
    h1 = jnp.maximum(h1, 0.0).astype(jnp.bfloat16)          # (256, tb) bf16

    # ---- fc2: the only real matmul (128x256); bf16 on the MXU, f32 acc. ----
    h2 = jnp.dot(w2_ref[...], h1, preferred_element_type=jnp.float32)
    h2 = jnp.maximum(h2 + b2_ref[...], 0.0)                 # (128, tb) f32

    # ---- fc3: N=1 -> VPU multiply + sublane reduce to a lane-dense (1, tb)
    # row (no masked stores on a (tb, 1) column).  Scalar bias from SMEM. ----
    o_ref[...] = (jnp.sum(h2 * w3_ref[...], axis=0, keepdims=True)
                  + b3_ref[0])


# --------------------------------------------------------------------------- #
# Wrapper
# --------------------------------------------------------------------------- #
def _round_up(n, m):
    return (n + m - 1) // m * m


def _fc1_dtype_for_device():
    # bf16 elementwise VPU math exists on v6e / v7x; v5e (and anything we do
    # not recognize) stays in f32.
    try:
        kind = jax.devices()[0].device_kind.lower()
    except Exception:
        return jnp.float32
    if "v6" in kind or "v7" in kind:
        return jnp.bfloat16
    return jnp.float32


def critic_forward(x_state, x_action, params, *, block_b=1024, fc1_dtype=None):
    """x_state: (B, 3) f32, x_action: (B, 1) f32 -> (B, 1) f32."""
    w1, b1, w2, b2, w3, b3 = params
    if fc1_dtype is None:
        fc1_dtype = _fc1_dtype_for_device()

    B = x_state.shape[0]

    # Pack state+action into one feature-major, lane-dense (4, B) slab.
    x = jnp.concatenate([x_state.astype(jnp.float32),
                         x_action.astype(jnp.float32)], axis=1)   # (B, 4)
    x = x.T.astype(fc1_dtype)                                     # (4, B)

    # ---- tile-size selection -------------------------------------------------
    # Large tiles amortize the ~0.35 us per-grid-step overhead, but keep >= 2
    # grid steps when the batch allows so dimension_semantics=('parallel',)
    # can shard across both TensorCores on v7x.  Everything is lane-aligned
    # (multiples of 128) and B is padded up so there is never a ragged or
    # whole-array fallback path (which could blow scoped VMEM on v7x).
    bp128 = _round_up(B, 128)
    bb = min(int(block_b), bp128)
    if bp128 >= 256:
        bb = min(bb, _round_up(-(-B // 2), 128))    # aim for >= 2 grid steps
    bb = _round_up(max(bb, 128), 128)
    Bp = _round_up(B, bb)
    grid = (Bp // bb,)

    if Bp > B:
        x = jnp.pad(x, ((0, 0), (0, Bp - B)))

    w1c = w1.astype(fc1_dtype)            # (256, 4)
    b1c = b1.astype(fc1_dtype)            # (256, 1)
    w2c = w2.astype(jnp.bfloat16)         # (128, 256)
    b2c = b2.astype(jnp.float32)          # (128, 1)
    w3c = w3.astype(jnp.float32)          # (128, 1)
    b3c = b3.astype(jnp.float32)          # (1,)
    operands = (x, w1c, b1c, w2c, b2c, w3c, b3c)

    def const_spec(shape):
        return pl.BlockSpec(shape, lambda i: (0,) * len(shape))

    in_specs = [
        pl.BlockSpec((4, bb), lambda i: (0, i)),              # x slab (4, tb)
        const_spec(w1c.shape),                                # W1  (256, 4)
        const_spec(b1c.shape),                                # b1  (256, 1)
        const_spec(w2c.shape),                                # W2  (128, 256) bf16
        const_spec(b2c.shape),                                # b2  (128, 1)
        const_spec(w3c.shape),                                # w3  (128, 1)
        pl.BlockSpec(memory_space=pltpu.MemorySpace.SMEM),    # b3 scalar
    ]

    flops = 2 * Bp * (4 * 256 + 256 * 128 + 128)
    bytes_accessed = (sum(int(op.size) * op.dtype.itemsize for op in operands)
                      + Bp * 4)
    cost = pl.CostEstimate(flops=flops, transcendentals=0,
                           bytes_accessed=bytes_accessed)

    out = pl.pallas_call(
        critic_kernel,
        out_shape=jax.ShapeDtypeStruct((1, Bp), jnp.float32),
        grid=grid,
        in_specs=in_specs,
        out_specs=pl.BlockSpec((1, bb), lambda i: (0, i)),
        compiler_params=pltpu.CompilerParams(
            dimension_semantics=("parallel",)),
        cost_estimate=cost,
    )(*operands)

    return out[:, :B].T                                       # (B, 1)


# --------------------------------------------------------------------------- #
# Params (torch nn.Linear default init), stored in feature-major kernel layout
# --------------------------------------------------------------------------- #
def init_params(key):
    k1, k2, k3 = jax.random.split(key, 3)

    def linear(k, fan_in, fan_out):
        kw, kb = jax.random.split(k)
        bound = float(fan_in) ** -0.5
        w = jax.random.uniform(kw, (fan_out, fan_in), jnp.float32, -bound, bound)
        b = jax.random.uniform(kb, (fan_out, 1), jnp.float32, -bound, bound)
        return w, b

    w1, b1 = linear(k1, 4, 256)      # (256, 4), (256, 1)
    w2, b2 = linear(k2, 256, 128)    # (128, 256), (128, 1)
    w3, b3 = linear(k3, 128, 1)      # (1, 128),  (1, 1)
    # fc2 weight stored bf16 (MXU native); fc3 weight as a (128, 1) column for
    # the sublane reduce; fc3 bias as a (1,) scalar for SMEM.
    return (w1, b1, w2.astype(jnp.bfloat16), b2, w3.T, b3[:, 0])


# --------------------------------------------------------------------------- #
# Pure-JAX reference mirroring the kernel's numerics
# --------------------------------------------------------------------------- #
def critic_reference(x_state, x_action, params, *, fc1_dtype=jnp.float32):
    w1, b1, w2, b2, w3, b3 = params
    x = jnp.concatenate([x_state, x_action], axis=1).astype(fc1_dtype)  # (B, 4)
    w1d = w1.astype(fc1_dtype).T        # (4, 256)
    b1d = b1.astype(fc1_dtype).T        # (1, 256)
    h1 = b1d + x[:, 0:1] * w1d[0:1, :]
    for k in range(1, 4):
        h1 = h1 + x[:, k:k + 1] * w1d[k:k + 1, :]
    h1 = jnp.maximum(h1, 0.0).astype(jnp.bfloat16)                      # (B, 256)
    h2 = jnp.dot(h1, w2.astype(jnp.bfloat16).T,
                 preferred_element_type=jnp.float32)
    h2 = jnp.maximum(h2 + b2.T, 0.0)                                    # (B, 128)
    return jnp.dot(h2, w3.astype(jnp.float32),
                   precision=jax.lax.Precision.HIGHEST) + b3[0]         # (B, 1)


if __name__ == "__main__":
    key = jax.random.PRNGKey(0)
    kp, ks, ka = jax.random.split(key, 3)
    params = init_params(kp)
    fc1_dtype = _fc1_dtype_for_device()

    # Pendulum-style shapes: state dim 3 + action dim 1 = fc1 in_features 4.
    B = 8
    x_state = jax.random.normal(ks, (B, 3), jnp.float32)
    x_action = jax.random.normal(ka, (B, 1), jnp.float32)

    out = jax.block_until_ready(
        critic_forward(x_state, x_action, params, fc1_dtype=fc1_dtype))
    ref = critic_reference(x_state, x_action, params, fc1_dtype=fc1_dtype)
    assert out.shape == (B, 1)
    assert jnp.allclose(out, ref, atol=2e-2, rtol=2e-2)

    # Larger batch that is NOT a tile multiple: exercises padding and the
    # 2-step "parallel" batch grid (both TensorCores on v7x).
    B2 = 384
    ks2, ka2 = jax.random.split(jax.random.PRNGKey(1))
    xs2 = jax.random.normal(ks2, (B2, 3), jnp.float32)
    xa2 = jax.random.normal(ka2, (B2, 1), jnp.float32)
    out2 = jax.block_until_ready(
        critic_forward(xs2, xa2, params, fc1_dtype=fc1_dtype))
    ref2 = critic_reference(xs2, xa2, params, fc1_dtype=fc1_dtype)
    assert out2.shape == (B2, 1)
    assert jnp.allclose(out2, ref2, atol=2e-2, rtol=2e-2)

    print("KERNEL_OK")
</pallas_src>

<mosaic_0001>
module attributes {stable_mosaic.version = 11 : i64} {
  func.func @critic_kernel(%arg0: i32, %arg1: memref<4x128xf32, #tpu.memory_space<vmem>>, %arg2: memref<256x4xf32, #tpu.memory_space<vmem>>, %arg3: memref<256x1xf32, #tpu.memory_space<vmem>>, %arg4: memref<128x256xbf16, #tpu.memory_space<vmem>>, %arg5: memref<128x1xf32, #tpu.memory_space<vmem>>, %arg6: memref<128x1xf32, #tpu.memory_space<vmem>>, %arg7: memref<1xf32, #tpu.memory_space<smem>>, %arg8: memref<1x128xf32, #tpu.memory_space<vmem>>) attributes {dimension_semantics = [#tpu.dimension_semantics<parallel>], iteration_bounds = array<i64: 1>, scalar_prefetch = 0 : i64, scratch_operands = 0 : i64, tpu.core_type = #tpu.core_type<tc>, window_params = [{transform_indices = @transform_0, window_bounds = array<i64: 4, 128>}, {pipeline_mode = #tpu.pipeline_mode<synchronous>, transform_indices = @transform_1, window_bounds = array<i64: 256, 4>}, {pipeline_mode = #tpu.pipeline_mode<synchronous>, transform_indices = @transform_2, window_bounds = array<i64: 256, 1>}, {pipeline_mode = #tpu.pipeline_mode<synchronous>, transform_indices = @transform_3, window_bounds = array<i64: 128, 256>}, {pipeline_mode = #tpu.pipeline_mode<synchronous>, transform_indices = @transform_4, window_bounds = array<i64: 128, 1>}, {pipeline_mode = #tpu.pipeline_mode<synchronous>, transform_indices = @transform_5, window_bounds = array<i64: 128, 1>}, {transform_indices = @transform_6, window_bounds = array<i64: 1>}, {transform_indices = @transform_7, window_bounds = array<i64: 1, 128>}]} {
    %c0 = arith.constant 0 : index
    %c0_0 = arith.constant 0 : index
    %0 = vector.load %arg1[%c0, %c0_0] : memref<4x128xf32, #tpu.memory_space<vmem>>, vector<4x128xf32>
    %c0_1 = arith.constant 0 : index
    %c0_2 = arith.constant 0 : index
    %1 = vector.load %arg2[%c0_1, %c0_2] : memref<256x4xf32, #tpu.memory_space<vmem>>, vector<256x4xf32>
    %c0_3 = arith.constant 0 : index
    %c0_4 = arith.constant 0 : index
    %2 = vector.load %arg3[%c0_3, %c0_4] : memref<256x1xf32, #tpu.memory_space<vmem>>, vector<256x1xf32>
    %3 = vector.extract_strided_slice %1 {offsets = [0, 0], sizes = [256, 1], strides = [1, 1]} : vector<256x4xf32> to vector<256x1xf32>
    %4 = vector.extract_strided_slice %0 {offsets = [0, 0], sizes = [1, 128], strides = [1, 1]} : vector<4x128xf32> to vector<1x128xf32>
    %5 = vector.broadcast %3 : vector<256x1xf32> to vector<256x128xf32>
    %6 = vector.broadcast %4 : vector<1x128xf32> to vector<256x128xf32>
    %7 = arith.mulf %5, %6 : vector<256x128xf32>
    %8 = vector.broadcast %2 : vector<256x1xf32> to vector<256x128xf32>
    %9 = arith.addf %8, %7 : vector<256x128xf32>
    %10 = vector.extract_strided_slice %1 {offsets = [0, 1], sizes = [256, 1], strides = [1, 1]} : vector<256x4xf32> to vector<256x1xf32>
    %11 = vector.extract_strided_slice %0 {offsets = [1, 0], sizes = [1, 128], strides = [1, 1]} : vector<4x128xf32> to vector<1x128xf32>
    %12 = vector.broadcast %10 : vector<256x1xf32> to vector<256x128xf32>
    %13 = vector.broadcast %11 : vector<1x128xf32> to vector<256x128xf32>
    %14 = arith.mulf %12, %13 : vector<256x128xf32>
    %15 = arith.addf %9, %14 : vector<256x128xf32>
    %16 = vector.extract_strided_slice %1 {offsets = [0, 2], sizes = [256, 1], strides = [1, 1]} : vector<256x4xf32> to vector<256x1xf32>
    %17 = vector.extract_strided_slice %0 {offsets = [2, 0], sizes = [1, 128], strides = [1, 1]} : vector<4x128xf32> to vector<1x128xf32>
    %18 = vector.broadcast %16 : vector<256x1xf32> to vector<256x128xf32>
    %19 = vector.broadcast %17 : vector<1x128xf32> to vector<256x128xf32>
    %20 = arith.mulf %18, %19 : vector<256x128xf32>
    %21 = arith.addf %15, %20 : vector<256x128xf32>
    %22 = vector.extract_strided_slice %1 {offsets = [0, 3], sizes = [256, 1], strides = [1, 1]} : vector<256x4xf32> to vector<256x1xf32>
    %23 = vector.extract_strided_slice %0 {offsets = [3, 0], sizes = [1, 128], strides = [1, 1]} : vector<4x128xf32> to vector<1x128xf32>
    %24 = vector.broadcast %22 : vector<256x1xf32> to vector<256x128xf32>
    %25 = vector.broadcast %23 : vector<1x128xf32> to vector<256x128xf32>
    %26 = arith.mulf %24, %25 : vector<256x128xf32>
    %27 = arith.addf %21, %26 : vector<256x128xf32>
    %cst = arith.constant 0.000000e+00 : f32
    %28 = vector.broadcast %cst : f32 to vector<256x128xf32>
    %29 = arith.maximumf %27, %28 : vector<256x128xf32>
    %30 = arith.truncf %29 : vector<256x128xf32> to vector<256x128xbf16>
    %c0_5 = arith.constant 0 : index
    %c0_6 = arith.constant 0 : index
    %31 = vector.load %arg4[%c0_5, %c0_6] : memref<128x256xbf16, #tpu.memory_space<vmem>>, vector<128x256xbf16>
    %cst_7 = arith.constant dense<0.000000e+00> : vector<128x128xf32>
    %32 = tpu.matmul %31, %30, %cst_7 {dimension_numbers = #tpu.dot_dimension_numbers<[1], [0], [0], [1], [0, 0, 1, 1], [], []>} : vector<128x256xbf16>, vector<256x128xbf16>, vector<128x128xf32> -> vector<128x128xf32>
    %c0_8 = arith.constant 0 : index
    %c0_9 = arith.constant 0 : index
    %33 = vector.load %arg5[%c0_8, %c0_9] : memref<128x1xf32, #tpu.memory_space<vmem>>, vector<128x1xf32>
    %34 = vector.broadcast %33 : vector<128x1xf32> to vector<128x128xf32>
    %35 = arith.addf %32, %34 : vector<128x128xf32>
    %cst_10 = arith.constant 0.000000e+00 : f32
    %36 = vector.broadcast %cst_10 : f32 to vector<128x128xf32>
    %37 = arith.maximumf %35, %36 : vector<128x128xf32>
    %c0_11 = arith.constant 0 : index
    %c0_12 = arith.constant 0 : index
    %38 = vector.load %arg6[%c0_11, %c0_12] : memref<128x1xf32, #tpu.memory_space<vmem>>, vector<128x1xf32>
    %39 = vector.broadcast %38 : vector<128x1xf32> to vector<128x128xf32>
    %40 = arith.mulf %37, %39 : vector<128x128xf32>
    %cst_13 = arith.constant dense<0.000000e+00> : vector<128xf32>
    %41 = vector.multi_reduction <add>, %40, %cst_13 [0] : vector<128x128xf32> to vector<128xf32>
    %42 = vector.shape_cast %41 : vector<128xf32> to vector<1x128xf32>
    %c0_14 = arith.constant 0 : index
    %43 = memref.load %arg7[%c0_14] : memref<1xf32, #tpu.memory_space<smem>>
    %44 = vector.broadcast %43 : f32 to vector<1x128xf32>
    %45 = arith.addf %42, %44 : vector<1x128xf32>
    %c0_15 = arith.constant 0 : index
    %c0_16 = arith.constant 0 : index
    %46 = vector.load %arg8[%c0_15, %c0_16] : memref<1x128xf32, #tpu.memory_space<vmem>>, vector<1x128xf32>
    tpu.vector_store %arg8[%c0_15, %c0_16], %45 {strides = array<i32>} : memref<1x128xf32, #tpu.memory_space<vmem>>, vector<1x128xf32>,
    return
  }
  func.func @transform_0(%arg0: i32) -> (i32, i32) {
    %c0_i32 = arith.constant 0 : i32
    %c0_i32_0 = arith.constant 0 : i32
    return %c0_i32, %arg0 : i32, i32
  }
  func.func @transform_1(%arg0: i32) -> (i32, i32) {
    %c0_i32 = arith.constant 0 : i32
    %c0_i32_0 = arith.constant 0 : i32
    %c0_i32_1 = arith.constant 0 : i32
    return %c0_i32, %c0_i32_0 : i32, i32
  }
  func.func @transform_2(%arg0: i32) -> (i32, i32) {
    %c0_i32 = arith.constant 0 : i32
    %c0_i32_0 = arith.constant 0 : i32
    %c0_i32_1 = arith.constant 0 : i32
    return %c0_i32, %c0_i32_0 : i32, i32
  }
  func.func @transform_3(%arg0: i32) -> (i32, i32) {
    %c0_i32 = arith.constant 0 : i32
    %c0_i32_0 = arith.constant 0 : i32
    %c0_i32_1 = arith.constant 0 : i32
    return %c0_i32, %c0_i32_0 : i32, i32
  }
  func.func @transform_4(%arg0: i32) -> (i32, i32) {
    %c0_i32 = arith.constant 0 : i32
    %c0_i32_0 = arith.constant 0 : i32
    %c0_i32_1 = arith.constant 0 : i32
    return %c0_i32, %c0_i32_0 : i32, i32
  }
  func.func @transform_5(%arg0: i32) -> (i32, i32) {
    %c0_i32 = arith.constant 0 : i32
    %c0_i32_0 = arith.constant 0 : i32
    %c0_i32_1 = arith.constant 0 : i32
    return %c0_i32, %c0_i32_0 : i32, i32
  }
  func.func @transform_6(%arg0: i32) -> i32 {
    %c0_i32 = arith.constant 0 : i32
    %c0_i32_0 = arith.constant 0 : i32
    return %c0_i32 : i32
  }
  func.func @transform_7(%arg0: i32) -> (i32, i32) {
    %c0_i32 = arith.constant 0 : i32
    %c0_i32_0 = arith.constant 0 : i32
    return %c0_i32, %arg0 : i32, i32
  }
}

</mosaic_0001>

<llo_original>
// kernel: tpu_custom_call.1
$region0: #{tpu_custom_call.1}
  #allocation0 [shape = 'u32[]', space=smem, size = 0x4, offset = 0x4, fixed_abs, tag = 'smem constant byte address 0x4 - core index']
  #allocation1 [shape = 'u32[144,128]{1,0:T(1,128)}', space=vmem, size = 0x12000, scoped, tag = 'internal scratch']
  #allocation2 [shape = 'f32[1]{0:T(128)S(6)}', space=smem, size = 0x200, scoped, tag = 'scoped memory for tpu_custom_call.1']
  %s0 = inlined_call_operand.vmem [shape: f32[4,128], index: 0, kind: input, shape index: {}]
  %s1 = inlined_call_operand.vmem [shape: f32[256,4], index: 1, kind: input, shape index: {}]
  %s2 = inlined_call_operand.vmem [shape: f32[256,1], index: 2, kind: input, shape index: {}]
  %s3 = inlined_call_operand.vmem [shape: bf16[128,256], index: 3, kind: input, shape index: {}]
  %s4 = inlined_call_operand.vmem [shape: f32[128,1], index: 4, kind: input, shape index: {}]
  %s5 = inlined_call_operand.vmem [shape: f32[128,1], index: 5, kind: input, shape index: {}]
  %s6 = inlined_call_operand.<no memory space> [shape: f32[1], index: 6, kind: input, shape index: {}]
  %s7 = inlined_call_operand.hbm [shape: f32[1,128], index: 7, kind: output, shape index: {}]
  %s8 = sld [smem:[#allocation0]]
  $region38: #{tpu_custom_call.1} parent=0
    _
  %s10 = ssub.s32 1, %s8
  %s11 = scalar_select 0, %s10, %s8
  %12 = sst [smem:[#allocation2]] %s6
  $region1: #{tpu_custom_call.1} parent=0
    #allocation3 [shape = 'u8[512]{0}', space=vmem, size = 0x400, scoped, tag = 'output window, operand 0, single buffered']
    #allocation4 [shape = 's32[1]{0}', space=sflag, size = 0x4, scoped, tag = 'scoped memory for tpu_custom_call.1']
    %13 = vsyncpa [#allocation4], 0
    // Predicated region
    $region2: #{tpu_custom_call.1} parent=1 // pred_check
      _
    $region3: #{tpu_custom_call.1} parent=1 // pred_check_branch
      %15 = sbr.rel (0) target = $region5
    $region4: #{tpu_custom_call.1} parent=1 // pred_region
      _
    $region5: #{tpu_custom_call.1} parent=1 // pred_fallthru
      _
    // Predicated region
    $region6: #{tpu_custom_call.1} parent=1 // pred_check
      _
    $region7: #{tpu_custom_call.1} parent=1 // pred_check_branch
      %17 = sbr.rel (0) target = $region9
    $region8: #{tpu_custom_call.1} parent=1 // pred_region
      _
    $region9: #{tpu_custom_call.1} parent=1 // pred_fallthru
      _
    // Predicated region
    $region10: #{tpu_custom_call.1} parent=1 // pred_check
      _
    $region11: #{tpu_custom_call.1} parent=1 // pred_check_branch
      %19 = sbr.rel (0) target = $region13
    $region12: #{tpu_custom_call.1} parent=1 // pred_region
      _
    $region13: #{tpu_custom_call.1} parent=1 // pred_fallthru
      _
    // Predicated region
    $region14: #{tpu_custom_call.1} parent=1 // pred_check
      _
    $region15: #{tpu_custom_call.1} parent=1 // pred_check_branch
      %21 = sbr.rel (0) target = $region17
    $region16: #{tpu_custom_call.1} parent=1 // pred_region
      _
    $region17: #{tpu_custom_call.1} parent=1 // pred_fallthru
      _
    // Predicated region
    $region18: #{tpu_custom_call.1} parent=1 // pred_check
      _
    $region19: #{tpu_custom_call.1} parent=1 // pred_check_branch
      %23 = sbr.rel (0) target = $region21
    $region20: #{tpu_custom_call.1} parent=1 // pred_region
      _
    $region21: #{tpu_custom_call.1} parent=1 // pred_fallthru
      _
    // Predicated region
    $region22: #{tpu_custom_call.1} parent=1 // pred_check
      _
    $region23: #{tpu_custom_call.1} parent=1 // pred_check_branch
      %25 = sbr.rel (0) target = $region25
    $region24: #{tpu_custom_call.1} parent=1 // pred_region
      _
    $region25: #{tpu_custom_call.1} parent=1 // pred_fallthru
      _
    // Predicated region
    $region26: #{tpu_custom_call.1} parent=1 // pred_check
      _
    $region27: #{tpu_custom_call.1} parent=1 // pred_check_branch
      %27 = sbr.rel (0) target = $region29
    $region28: #{tpu_custom_call.1} parent=1 // pred_region
      _
    $region29: #{tpu_custom_call.1} parent=1 // pred_fallthru
      _
    %v29 = vld [vmem:[%s0] sm:$0xf]
    %v30 = vld [vmem:[%s1] sm:$0xff]
    %v31 = vld [vmem:[%s1 + $0x8] sm:$0xff]
    %v32 = vld [vmem:[%s1 + $0x10] sm:$0xff]
    %v33 = vld [vmem:[%s1 + $0x18] sm:$0xff]
    %v34 = vld [vmem:[%s1 + $0x20] sm:$0xff]
    %v35 = vld [vmem:[%s1 + $0x28] sm:$0xff]
    %v36 = vld [vmem:[%s1 + $0x30] sm:$0xff]
    %v37 = vld [vmem:[%s1 + $0x38] sm:$0xff]
    %v38 = vld [vmem:[%s1 + $0x40] sm:$0xff]
    %v39 = vld [vmem:[%s1 + $0x48] sm:$0xff]
    %v40 = vld [vmem:[%s1 + $0x50] sm:$0xff]
    %v41 = vld [vmem:[%s1 + $0x58] sm:$0xff]
    %v42 = vld [vmem:[%s1 + $0x60] sm:$0xff]
    %v43 = vld [vmem:[%s1 + $0x68] sm:$0xff]
    %v44 = vld [vmem:[%s1 + $0x70] sm:$0xff]
    %v45 = vld [vmem:[%s1 + $0x78] sm:$0xff]
    %v46 = vld [vmem:[%s1 + $0x80] sm:$0xff]
    %v47 = vld [vmem:[%s1 + $0x88] sm:$0xff]
    %v48 = vld [vmem:[%s1 + $0x90] sm:$0xff]
    %v49 = vld [vmem:[%s1 + $0x98] sm:$0xff]
    %v50 = vld [vmem:[%s1 + $0xa0] sm:$0xff]
    %v51 = vld [vmem:[%s1 + $0xa8] sm:$0xff]
    %v52 = vld [vmem:[%s1 + $0xb0] sm:$0xff]
    %v53 = vld [vmem:[%s1 + $0xb8] sm:$0xff]
    %v54 = vld [vmem:[%s1 + $0xc0] sm:$0xff]
    %v55 = vld [vmem:[%s1 + $0xc8] sm:$0xff]
    %v56 = vld [vmem:[%s1 + $0xd0] sm:$0xff]
    %v57 = vld [vmem:[%s1 + $0xd8] sm:$0xff]
    %v58 = vld [vmem:[%s1 + $0xe0] sm:$0xff]
    %v59 = vld [vmem:[%s1 + $0xe8] sm:$0xff]
    %v60 = vld [vmem:[%s1 + $0xf0] sm:$0xff]
    %v61 = vld [vmem:[%s1 + $0xf8] sm:$0xff]
    %v62 = vld [vmem:[%s2] sm:$0xff]
    %v63 = vld [vmem:[%s2 + $0x8] sm:$0xff]
    %v64 = vld [vmem:[%s2 + $0x10] sm:$0xff]
    %v65 = vld [vmem:[%s2 + $0x18] sm:$0xff]
    %v66 = vld [vmem:[%s2 + $0x20] sm:$0xff]
    %v67 = vld [vmem:[%s2 + $0x28] sm:$0xff]
    %v68 = vld [vmem:[%s2 + $0x30] sm:$0xff]
    %v69 = vld [vmem:[%s2 + $0x38] sm:$0xff]
    %v70 = vld [vmem:[%s2 + $0x40] sm:$0xff]
    %v71 = vld [vmem:[%s2 + $0x48] sm:$0xff]
    %v72 = vld [vmem:[%s2 + $0x50] sm:$0xff]
    %v73 = vld [vmem:[%s2 + $0x58] sm:$0xff]
    %v74 = vld [vmem:[%s2 + $0x60] sm:$0xff]
    %v75 = vld [vmem:[%s2 + $0x68] sm:$0xff]
    %v76 = vld [vmem:[%s2 + $0x70] sm:$0xff]
    %v77 = vld [vmem:[%s2 + $0x78] sm:$0xff]
    %v78 = vld [vmem:[%s2 + $0x80] sm:$0xff]
    %v79 = vld [vmem:[%s2 + $0x88] sm:$0xff]
    %v80 = vld [vmem:[%s2 + $0x90] sm:$0xff]
    %v81 = vld [vmem:[%s2 + $0x98] sm:$0xff]
    %v82 = vld [vmem:[%s2 + $0xa0] sm:$0xff]
    %v83 = vld [vmem:[%s2 + $0xa8] sm:$0xff]
    %v84 = vld [vmem:[%s2 + $0xb0] sm:$0xff]
    %v85 = vld [vmem:[%s2 + $0xb8] sm:$0xff]
    %v86 = vld [vmem:[%s2 + $0xc0] sm:$0xff]
    %v87 = vld [vmem:[%s2 + $0xc8] sm:$0xff]
    %v88 = vld [vmem:[%s2 + $0xd0] sm:$0xff]
    %v89 = vld [vmem:[%s2 + $0xd8] sm:$0xff]
    %v90 = vld [vmem:[%s2 + $0xe0] sm:$0xff]
    %v91 = vld [vmem:[%s2 + $0xe8] sm:$0xff]
    %v92 = vld [vmem:[%s2 + $0xf0] sm:$0xff]
    %v93 = vld [vmem:[%s2 + $0xf8] sm:$0xff]
    %95 = vset.pattern.permute.xlu0 0
    %96 = vperm.xlu0 %95, %v30
    %v97 = vpop.permute.xlu0 %96
    %100 = vset.pattern.permute.xlu0 0
    %101 = vperm.xlu0 %100, %v31
    %v102 = vpop.permute.xlu0 %101
    %105 = vset.pattern.permute.xlu0 0
    %106 = vperm.xlu0 %105, %v32
    %v107 = vpop.permute.xlu0 %106
    %110 = vset.pattern.permute.xlu0 0
    %111 = vperm.xlu0 %110, %v33
    %v112 = vpop.permute.xlu0 %111
    %115 = vset.pattern.permute.xlu0 0
    %116 = vperm.xlu0 %115, %v34
    %v117 = vpop.permute.xlu0 %116
    %120 = vset.pattern.permute.xlu0 0
    %121 = vperm.xlu0 %120, %v35
    %v122 = vpop.permute.xlu0 %121
    %125 = vset.pattern.permute.xlu0 0
    %126 = vperm.xlu0 %125, %v36
    %v127 = vpop.permute.xlu0 %126
    %130 = vset.pattern.permute.xlu0 0
    %131 = vperm.xlu0 %130, %v37
    %v132 = vpop.permute.xlu0 %131
    %135 = vset.pattern.permute.xlu0 0
    %136 = vperm.xlu0 %135, %v38
    %v137 = vpop.permute.xlu0 %136
    %140 = vset.pattern.permute.xlu0 0
    %141 = vperm.xlu0 %140, %v39
    %v142 = vpop.permute.xlu0 %141
    %145 = vset.pattern.permute.xlu0 0
    %146 = vperm.xlu0 %145, %v40
    %v147 = vpop.permute.xlu0 %146
    %150 = vset.pattern.permute.xlu0 0
    %151 = vperm.xlu0 %150, %v41
    %v152 = vpop.permute.xlu0 %151
    %155 = vset.pattern.permute.xlu0 0
    %156 = vperm.xlu0 %155, %v42
    %v157 = vpop.permute.xlu0 %156
    %160 = vset.pattern.permute.xlu0 0
    %161 = vperm.xlu0 %160, %v43
    %v162 = vpop.permute.xlu0 %161
    %165 = vset.pattern.permute.xlu0 0
    %166 = vperm.xlu0 %165, %v44
    %v167 = vpop.permute.xlu0 %166
    %170 = vset.pattern.permute.xlu0 0
    %171 = vperm.xlu0 %170, %v45
    %v172 = vpop.permute.xlu0 %171
    %175 = vset.pattern.permute.xlu0 0
    %176 = vperm.xlu0 %175, %v46
    %v177 = vpop.permute.xlu0 %176
    %180 = vset.pattern.permute.xlu0 0
    %181 = vperm.xlu0 %180, %v47
    %v182 = vpop.permute.xlu0 %181
    %185 = vset.pattern.permute.xlu0 0
    %186 = vperm.xlu0 %185, %v48
    %v187 = vpop.permute.xlu0 %186
    %190 = vset.pattern.permute.xlu0 0
    %191 = vperm.xlu0 %190, %v49
    %v192 = vpop.permute.xlu0 %191
    %195 = vset.pattern.permute.xlu0 0
    %196 = vperm.xlu0 %195, %v50
    %v197 = vpop.permute.xlu0 %196
    %200 = vset.pattern.permute.xlu0 0
    %201 = vperm.xlu0 %200, %v51
    %v202 = vpop.permute.xlu0 %201
    %205 = vset.pattern.permute.xlu0 0
    %206 = vperm.xlu0 %205, %v52
    %v207 = vpop.permute.xlu0 %206
    %210 = vset.pattern.permute.xlu0 0
    %211 = vperm.xlu0 %210, %v53
    %v212 = vpop.permute.xlu0 %211
    %215 = vset.pattern.permute.xlu0 0
    %216 = vperm.xlu0 %215, %v54
    %v217 = vpop.permute.xlu0 %216
    %220 = vset.pattern.permute.xlu0 0
    %221 = vperm.xlu0 %220, %v55
    %v222 = vpop.permute.xlu0 %221
    %225 = vset.pattern.permute.xlu0 0
    %226 = vperm.xlu0 %225, %v56
    %v227 = vpop.permute.xlu0 %226
    %230 = vset.pattern.permute.xlu0 0
    %231 = vperm.xlu0 %230, %v57
    %v232 = vpop.permute.xlu0 %231
    %235 = vset.pattern.permute.xlu0 0
    %236 = vperm.xlu0 %235, %v58
    %v237 = vpop.permute.xlu0 %236
    %240 = vset.pattern.permute.xlu0 0
    %241 = vperm.xlu0 %240, %v59
    %v242 = vpop.permute.xlu0 %241
    %245 = vset.pattern.permute.xlu0 0
    %246 = vperm.xlu0 %245, %v60
    %v247 = vpop.permute.xlu0 %246
    %250 = vset.pattern.permute.xlu0 0
    %251 = vperm.xlu0 %250, %v61
    %v252 = vpop.permute.xlu0 %251
    %v254 = vlaneseq
    %v255 = vshrl.u32 %v254, 7
    %v256 = vsub.s32 0, %v255
    %v257 = vrot.slane %v29, %v256
    %v258 = vmul.f32 %v97, %v257
    %v259 = vmul.f32 %v102, %v257
    %v260 = vmul.f32 %v107, %v257
    %v261 = vmul.f32 %v112, %v257
    %v262 = vmul.f32 %v117, %v257
    %v263 = vmul.f32 %v122, %v257
    %v264 = vmul.f32 %v127, %v257
    %v265 = vmul.f32 %v132, %v257
    %v266 = vmul.f32 %v137, %v257
    %v267 = vmul.f32 %v142, %v257
    %v268 = vmul.f32 %v147, %v257
    %v269 = vmul.f32 %v152, %v257
    %v270 = vmul.f32 %v157, %v257
    %v271 = vmul.f32 %v162, %v257
    %v272 = vmul.f32 %v167, %v257
    %v273 = vmul.f32 %v172, %v257
    %v274 = vmul.f32 %v177, %v257
    %v275 = vmul.f32 %v182, %v257
    %v276 = vmul.f32 %v187, %v257
    %v277 = vmul.f32 %v192, %v257
    %v278 = vmul.f32 %v197, %v257
    %v279 = vmul.f32 %v202, %v257
    %v280 = vmul.f32 %v207, %v257
    %v281 = vmul.f32 %v212, %v257
    %v282 = vmul.f32 %v217, %v257
    %v283 = vmul.f32 %v222, %v257
    %v284 = vmul.f32 %v227, %v257
    %v285 = vmul.f32 %v232, %v257
    %v286 = vmul.f32 %v237, %v257
    %v287 = vmul.f32 %v242, %v257
    %v288 = vmul.f32 %v247, %v257
    %v289 = vmul.f32 %v252, %v257
    %291 = vset.pattern.permute.xlu0 0
    %292 = vperm.xlu0 %291, %v62
    %v293 = vpop.permute.xlu0 %292
    %296 = vset.pattern.permute.xlu0 0
    %297 = vperm.xlu0 %296, %v63
    %v298 = vpop.permute.xlu0 %297
    %301 = vset.pattern.permute.xlu0 0
    %302 = vperm.xlu0 %301, %v64
    %v303 = vpop.permute.xlu0 %302
    %306 = vset.pattern.permute.xlu0 0
    %307 = vperm.xlu0 %306, %v65
    %v308 = vpop.permute.xlu0 %307
    %311 = vset.pattern.permute.xlu0 0
    %312 = vperm.xlu0 %311, %v66
    %v313 = vpop.permute.xlu0 %312
    %316 = vset.pattern.permute.xlu0 0
    %317 = vperm.xlu0 %316, %v67
    %v318 = vpop.permute.xlu0 %317
    %321 = vset.pattern.permute.xlu0 0
    %322 = vperm.xlu0 %321, %v68
    %v323 = vpop.permute.xlu0 %322
    %326 = vset.pattern.permute.xlu0 0
    %327 = vperm.xlu0 %326, %v69
    %v328 = vpop.permute.xlu0 %327
    %331 = vset.pattern.permute.xlu0 0
    %332 = vperm.xlu0 %331, %v70
    %v333 = vpop.permute.xlu0 %332
    %336 = vset.pattern.permute.xlu0 0
    %337 = vperm.xlu0 %336, %v71
    %v338 = vpop.permute.xlu0 %337
    %341 = vset.pattern.permute.xlu0 0
    %342 = vperm.xlu0 %341, %v72
    %v343 = vpop.permute.xlu0 %342
    %346 = vset.pattern.permute.xlu0 0
    %347 = vperm.xlu0 %346, %v73
    %v348 = vpop.permute.xlu0 %347
    %351 = vset.pattern.permute.xlu0 0
    %352 = vperm.xlu0 %351, %v74
    %v353 = vpop.permute.xlu0 %352
    %356 = vset.pattern.permute.xlu0 0
    %357 = vperm.xlu0 %356, %v75
    %v358 = vpop.permute.xlu0 %357
    %361 = vset.pattern.permute.xlu0 0
    %362 = vperm.xlu0 %361, %v76
    %v363 = vpop.permute.xlu0 %362
    %366 = vset.pattern.permute.xlu0 0
    %367 = vperm.xlu0 %366, %v77
    %v368 = vpop.permute.xlu0 %367
    %371 = vset.pattern.permute.xlu0 0
    %372 = vperm.xlu0 %371, %v78
    %v373 = vpop.permute.xlu0 %372
    %376 = vset.pattern.permute.xlu0 0
    %377 = vperm.xlu0 %376, %v79
    %v378 = vpop.permute.xlu0 %377
    %381 = vset.pattern.permute.xlu0 0
    %382 = vperm.xlu0 %381, %v80
    %v383 = vpop.permute.xlu0 %382
    %386 = vset.pattern.permute.xlu0 0
    %387 = vperm.xlu0 %386, %v81
    %v388 = vpop.permute.xlu0 %387
    %391 = vset.pattern.permute.xlu0 0
    %392 = vperm.xlu0 %391, %v82
    %v393 = vpop.permute.xlu0 %392
    %396 = vset.pattern.permute.xlu0 0
    %397 = vperm.xlu0 %396, %v83
    %v398 = vpop.permute.xlu0 %397
    %401 = vset.pattern.permute.xlu0 0
    %402 = vperm.xlu0 %401, %v84
    %v403 = vpop.permute.xlu0 %402
    %406 = vset.pattern.permute.xlu0 0
    %407 = vperm.xlu0 %406, %v85
    %v408 = vpop.permute.xlu0 %407
    %411 = vset.pattern.permute.xlu0 0
    %412 = vperm.xlu0 %411, %v86
    %v413 = vpop.permute.xlu0 %412
    %416 = vset.pattern.permute.xlu0 0
    %417 = vperm.xlu0 %416, %v87
    %v418 = vpop.permute.xlu0 %417
    %421 = vset.pattern.permute.xlu0 0
    %422 = vperm.xlu0 %421, %v88
    %v423 = vpop.permute.xlu0 %422
    %426 = vset.pattern.permute.xlu0 0
    %427 = vperm.xlu0 %426, %v89
    %v428 = vpop.permute.xlu0 %427
    %431 = vset.pattern.permute.xlu0 0
    %432 = vperm.xlu0 %431, %v90
    %v433 = vpop.permute.xlu0 %432
    %436 = vset.pattern.permute.xlu0 0
    %437 = vperm.xlu0 %436, %v91
    %v438 = vpop.permute.xlu0 %437
    %441 = vset.pattern.permute.xlu0 0
    %442 = vperm.xlu0 %441, %v92
    %v443 = vpop.permute.xlu0 %442
    %446 = vset.pattern.permute.xlu0 0
    %447 = vperm.xlu0 %446, %v93
    %v448 = vpop.permute.xlu0 %447
    %v450 = vadd.f32 %v293, %v258
    %v451 = vadd.f32 %v298, %v259
    %v452 = vadd.f32 %v303, %v260
    %v453 = vadd.f32 %v308, %v261
    %v454 = vadd.f32 %v313, %v262
    %v455 = vadd.f32 %v318, %v263
    %v456 = vadd.f32 %v323, %v264
    %v457 = vadd.f32 %v328, %v265
    %v458 = vadd.f32 %v333, %v266
    %v459 = vadd.f32 %v338, %v267
    %v460 = vadd.f32 %v343, %v268
    %v461 = vadd.f32 %v348, %v269
    %v462 = vadd.f32 %v353, %v270
    %v463 = vadd.f32 %v358, %v271
    %v464 = vadd.f32 %v363, %v272
    %v465 = vadd.f32 %v368, %v273
    %v466 = vadd.f32 %v373, %v274
    %v467 = vadd.f32 %v378, %v275
    %v468 = vadd.f32 %v383, %v276
    %v469 = vadd.f32 %v388, %v277
    %v470 = vadd.f32 %v393, %v278
    %v471 = vadd.f32 %v398, %v279
    %v472 = vadd.f32 %v403, %v280
    %v473 = vadd.f32 %v408, %v281
    %v474 = vadd.f32 %v413, %v282
    %v475 = vadd.f32 %v418, %v283
    %v476 = vadd.f32 %v423, %v284
    %v477 = vadd.f32 %v428, %v285
    %v478 = vadd.f32 %v433, %v286
    %v479 = vadd.f32 %v438, %v287
    %v480 = vadd.f32 %v443, %v288
    %v481 = vadd.f32 %v448, %v289
    %482 = vset.pattern.permute.xlu0 1
    %483 = vperm.xlu0 %482, %v30
    %v484 = vpop.permute.xlu0 %483
    %486 = vset.pattern.permute.xlu0 1
    %487 = vperm.xlu0 %486, %v31
    %v488 = vpop.permute.xlu0 %487
    %490 = vset.pattern.permute.xlu0 1
    %491 = vperm.xlu0 %490, %v32
    %v492 = vpop.permute.xlu0 %491
    %494 = vset.pattern.permute.xlu0 1
    %495 = vperm.xlu0 %494, %v33
    %v496 = vpop.permute.xlu0 %495
    %498 = vset.pattern.permute.xlu0 1
    %499 = vperm.xlu0 %498, %v34
    %v500 = vpop.permute.xlu0 %499
    %502 = vset.pattern.permute.xlu0 1
    %503 = vperm.xlu0 %502, %v35
    %v504 = vpop.permute.xlu0 %503
    %506 = vset.pattern.permute.xlu0 1
    %507 = vperm.xlu0 %506, %v36
    %v508 = vpop.permute.xlu0 %507
    %510 = vset.pattern.permute.xlu0 1
    %511 = vperm.xlu0 %510, %v37
    %v512 = vpop.permute.xlu0 %511
    %514 = vset.pattern.permute.xlu0 1
    %515 = vperm.xlu0 %514, %v38
    %v516 = vpop.permute.xlu0 %515
    %518 = vset.pattern.permute.xlu0 1
    %519 = vperm.xlu0 %518, %v39
    %v520 = vpop.permute.xlu0 %519
    %522 = vset.pattern.permute.xlu0 1
    %523 = vperm.xlu0 %522, %v40
    %v524 = vpop.permute.xlu0 %523
    %526 = vset.pattern.permute.xlu0 1
    %527 = vperm.xlu0 %526, %v41
    %v528 = vpop.permute.xlu0 %527
    %530 = vset.pattern.permute.xlu0 1
    %531 = vperm.xlu0 %530, %v42
    %v532 = vpop.permute.xlu0 %531
    %534 = vset.pattern.permute.xlu0 1
    %535 = vperm.xlu0 %534, %v43
    %v536 = vpop.permute.xlu0 %535
    %538 = vset.pattern.permute.xlu0 1
    %539 = vperm.xlu0 %538, %v44
    %v540 = vpop.permute.xlu0 %539
    %542 = vset.pattern.permute.xlu0 1
    %543 = vperm.xlu0 %542, %v45
    %v544 = vpop.permute.xlu0 %543
    %546 = vset.pattern.permute.xlu0 1
    %547 = vperm.xlu0 %546, %v46
    %v548 = vpop.permute.xlu0 %547
    %550 = vset.pattern.permute.xlu0 1
    %551 = vperm.xlu0 %550, %v47
    %v552 = vpop.permute.xlu0 %551
    %554 = vset.pattern.permute.xlu0 1
    %555 = vperm.xlu0 %554, %v48
    %v556 = vpop.permute.xlu0 %555
    %558 = vset.pattern.permute.xlu0 1
    %559 = vperm.xlu0 %558, %v49
    %v560 = vpop.permute.xlu0 %559
    %562 = vset.pattern.permute.xlu0 1
    %563 = vperm.xlu0 %562, %v50
    %v564 = vpop.permute.xlu0 %563
    %566 = vset.pattern.permute.xlu0 1
    %567 = vperm.xlu0 %566, %v51
    %v568 = vpop.permute.xlu0 %567
    %570 = vset.pattern.permute.xlu0 1
    %571 = vperm.xlu0 %570, %v52
    %v572 = vpop.permute.xlu0 %571
    %574 = vset.pattern.permute.xlu0 1
    %575 = vperm.xlu0 %574, %v53
    %v576 = vpop.permute.xlu0 %575
    %578 = vset.pattern.permute.xlu0 1
    %579 = vperm.xlu0 %578, %v54
    %v580 = vpop.permute.xlu0 %579
    %582 = vset.pattern.permute.xlu0 1
    %583 = vperm.xlu0 %582, %v55
    %v584 = vpop.permute.xlu0 %583
    %586 = vset.pattern.permute.xlu0 1
    %587 = vperm.xlu0 %586, %v56
    %v588 = vpop.permute.xlu0 %587
    %590 = vset.pattern.permute.xlu0 1
    %591 = vperm.xlu0 %590, %v57
    %v592 = vpop.permute.xlu0 %591
    %594 = vset.pattern.permute.xlu0 1
    %595 = vperm.xlu0 %594, %v58
    %v596 = vpop.permute.xlu0 %595
    %598 = vset.pattern.permute.xlu0 1
    %599 = vperm.xlu0 %598, %v59
    %v600 = vpop.permute.xlu0 %599
    %602 = vset.pattern.permute.xlu0 1
    %603 = vperm.xlu0 %602, %v60
    %v604 = vpop.permute.xlu0 %603
    %606 = vset.pattern.permute.xlu0 1
    %607 = vperm.xlu0 %606, %v61
    %v608 = vpop.permute.xlu0 %607
    %v610 = vlaneseq
    %v611 = vshrl.u32 %v610, 7
    %v612 = vsub.s32 1, %v611
    %v613 = vrot.slane %v29, %v612
    %v614 = vmul.f32 %v484, %v613
    %v615 = vmul.f32 %v488, %v613
    %v616 = vmul.f32 %v492, %v613
    %v617 = vmul.f32 %v496, %v613
    %v618 = vmul.f32 %v500, %v613
    %v619 = vmul.f32 %v504, %v613
    %v620 = vmul.f32 %v508, %v613
    %v621 = vmul.f32 %v512, %v613
    %v622 = vmul.f32 %v516, %v613
    %v623 = vmul.f32 %v520, %v613
    %v624 = vmul.f32 %v524, %v613
    %v625 = vmul.f32 %v528, %v613
    %v626 = vmul.f32 %v532, %v613
    %v627 = vmul.f32 %v536, %v613
    %v628 = vmul.f32 %v540, %v613
    %v629 = vmul.f32 %v544, %v613
    %v630 = vmul.f32 %v548, %v613
    %v631 = vmul.f32 %v552, %v613
    %v632 = vmul.f32 %v556, %v613
    %v633 = vmul.f32 %v560, %v613
    %v634 = vmul.f32 %v564, %v613
    %v635 = vmul.f32 %v568, %v613
    %v636 = vmul.f32 %v572, %v613
    %v637 = vmul.f32 %v576, %v613
    %v638 = vmul.f32 %v580, %v613
    %v639 = vmul.f32 %v584, %v613
    %v640 = vmul.f32 %v588, %v613
    %v641 = vmul.f32 %v592, %v613
    %v642 = vmul.f32 %v596, %v613
    %v643 = vmul.f32 %v600, %v613
    %v644 = vmul.f32 %v604, %v613
    %v645 = vmul.f32 %v608, %v613
    %v646 = vadd.f32 %v450, %v614
    %v647 = vadd.f32 %v451, %v615
    %v648 = vadd.f32 %v452, %v616
    %v649 = vadd.f32 %v453, %v617
    %v650 = vadd.f32 %v454, %v618
    %v651 = vadd.f32 %v455, %v619
    %v652 = vadd.f32 %v456, %v620
    %v653 = vadd.f32 %v457, %v621
    %v654 = vadd.f32 %v458, %v622
    %v655 = vadd.f32 %v459, %v623
    %v656 = vadd.f32 %v460, %v624
    %v657 = vadd.f32 %v461, %v625
    %v658 = vadd.f32 %v462, %v626
    %v659 = vadd.f32 %v463, %v627
    %v660 = vadd.f32 %v464, %v628
    %v661 = vadd.f32 %v465, %v629
    %v662 = vadd.f32 %v466, %v630
    %v663 = vadd.f32 %v467, %v631
    %v664 = vadd.f32 %v468, %v632
    %v665 = vadd.f32 %v469, %v633
    %v666 = vadd.f32 %v470, %v634
    %v667 = vadd.f32 %v471, %v635
    %v668 = vadd.f32 %v472, %v636
    %v669 = vadd.f32 %v473, %v637
    %v670 = vadd.f32 %v474, %v638
    %v671 = vadd.f32 %v475, %v639
    %v672 = vadd.f32 %v476, %v640
    %v673 = vadd.f32 %v477, %v641
    %v674 = vadd.f32 %v478, %v642
    %v675 = vadd.f32 %v479, %v643
    %v676 = vadd.f32 %v480, %v644
    %v677 = vadd.f32 %v481, %v645
    %678 = vset.pattern.permute.xlu0 2
    %679 = vperm.xlu0 %678, %v30
    %v680 = vpop.permute.xlu0 %679
    %682 = vset.pattern.permute.xlu0 2
    %683 = vperm.xlu0 %682, %v31
    %v684 = vpop.permute.xlu0 %683
    %686 = vset.pattern.permute.xlu0 2
    %687 = vperm.xlu0 %686, %v32
    %v688 = vpop.permute.xlu0 %687
    %690 = vset.pattern.permute.xlu0 2
    %691 = vperm.xlu0 %690, %v33
    %v692 = vpop.permute.xlu0 %691
    %694 = vset.pattern.permute.xlu0 2
    %695 = vperm.xlu0 %694, %v34
    %v696 = vpop.permute.xlu0 %695
    %698 = vset.pattern.permute.xlu0 2
    %699 = vperm.xlu0 %698, %v35
    %v700 = vpop.permute.xlu0 %699
    %702 = vset.pattern.permute.xlu0 2
    %703 = vperm.xlu0 %702, %v36
    %v704 = vpop.permute.xlu0 %703
    %706 = vset.pattern.permute.xlu0 2
    %707 = vperm.xlu0 %706, %v37
    %v708 = vpop.permute.xlu0 %707
    %710 = vset.pattern.permute.xlu0 2
    %711 = vperm.xlu0 %710, %v38
    %v712 = vpop.permute.xlu0 %711
    %714 = vset.pattern.permute.xlu0 2
    %715 = vperm.xlu0 %714, %v39
    %v716 = vpop.permute.xlu0 %715
    %718 = vset.pattern.permute.xlu0 2
    %719 = vperm.xlu0 %718, %v40
    %v720 = vpop.permute.xlu0 %719
    %722 = vset.pattern.permute.xlu0 2
    %723 = vperm.xlu0 %722, %v41
    %v724 = vpop.permute.xlu0 %723
    %726 = vset.pattern.permute.xlu0 2
    %727 = vperm.xlu0 %726, %v42
    %v728 = vpop.permute.xlu0 %727
    %730 = vset.pattern.permute.xlu0 2
    %731 = vperm.xlu0 %730, %v43
    %v732 = vpop.permute.xlu0 %731
    %734 = vset.pattern.permute.xlu0 2
    %735 = vperm.xlu0 %734, %v44
    %v736 = vpop.permute.xlu0 %735
    %738 = vset.pattern.permute.xlu0 2
    %739 = vperm.xlu0 %738, %v45
    %v740 = vpop.permute.xlu0 %739
    %742 = vset.pattern.permute.xlu0 2
    %743 = vperm.xlu0 %742, %v46
    %v744 = vpop.permute.xlu0 %743
    %746 = vset.pattern.permute.xlu0 2
    %747 = vperm.xlu0 %746, %v47
    %v748 = vpop.permute.xlu0 %747
    %750 = vset.pattern.permute.xlu0 2
    %751 = vperm.xlu0 %750, %v48
    %v752 = vpop.permute.xlu0 %751
    %754 = vset.pattern.permute.xlu0 2
    %755 = vperm.xlu0 %754, %v49
    %v756 = vpop.permute.xlu0 %755
    %758 = vset.pattern.permute.xlu0 2
    %759 = vperm.xlu0 %758, %v50
    %v760 = vpop.permute.xlu0 %759
    %762 = vset.pattern.permute.xlu0 2
    %763 = vperm.xlu0 %762, %v51
    %v764 = vpop.permute.xlu0 %763
    %766 = vset.pattern.permute.xlu0 2
    %767 = vperm.xlu0 %766, %v52
    %v768 = vpop.permute.xlu0 %767
    %770 = vset.pattern.permute.xlu0 2
    %771 = vperm.xlu0 %770, %v53
    %v772 = vpop.permute.xlu0 %771
    %774 = vset.pattern.permute.xlu0 2
    %775 = vperm.xlu0 %774, %v54
    %v776 = vpop.permute.xlu0 %775
    %778 = vset.pattern.permute.xlu0 2
    %779 = vperm.xlu0 %778, %v55
    %v780 = vpop.permute.xlu0 %779
    %782 = vset.pattern.permute.xlu0 2
    %783 = vperm.xlu0 %782, %v56
    %v784 = vpop.permute.xlu0 %783
    %786 = vset.pattern.permute.xlu0 2
    %787 = vperm.xlu0 %786, %v57
    %v788 = vpop.permute.xlu0 %787
    %790 = vset.pattern.permute.xlu0 2
    %791 = vperm.xlu0 %790, %v58
    %v792 = vpop.permute.xlu0 %791
    %794 = vset.pattern.permute.xlu0 2
    %795 = vperm.xlu0 %794, %v59
    %v796 = vpop.permute.xlu0 %795
    %798 = vset.pattern.permute.xlu0 2
    %799 = vperm.xlu0 %798, %v60
    %v800 = vpop.permute.xlu0 %799
    %802 = vset.pattern.permute.xlu0 2
    %803 = vperm.xlu0 %802, %v61
    %v804 = vpop.permute.xlu0 %803
    %v806 = vlaneseq
    %v807 = vshrl.u32 %v806, 7
    %v808 = vsub.s32 2, %v807
    %v809 = vrot.slane %v29, %v808
    %v810 = vmul.f32 %v680, %v809
    %v811 = vmul.f32 %v684, %v809
    %v812 = vmul.f32 %v688, %v809
    %v813 = vmul.f32 %v692, %v809
    %v814 = vmul.f32 %v696, %v809
    %v815 = vmul.f32 %v700, %v809
    %v816 = vmul.f32 %v704, %v809
    %v817 = vmul.f32 %v708, %v809
    %v818 = vmul.f32 %v712, %v809
    %v819 = vmul.f32 %v716, %v809
    %v820 = vmul.f32 %v720, %v809
    %v821 = vmul.f32 %v724, %v809
    %v822 = vmul.f32 %v728, %v809
    %v823 = vmul.f32 %v732, %v809
    %v824 = vmul.f32 %v736, %v809
    %v825 = vmul.f32 %v740, %v809
    %v826 = vmul.f32 %v744, %v809
    %v827 = vmul.f32 %v748, %v809
    %v828 = vmul.f32 %v752, %v809
    %v829 = vmul.f32 %v756, %v809
    %v830 = vmul.f32 %v760, %v809
    %v831 = vmul.f32 %v764, %v809
    %v832 = vmul.f32 %v768, %v809
    %v833 = vmul.f32 %v772, %v809
    %v834 = vmul.f32 %v776, %v809
    %v835 = vmul.f32 %v780, %v809
    %v836 = vmul.f32 %v784, %v809
    %v837 = vmul.f32 %v788, %v809
    %v838 = vmul.f32 %v792, %v809
    %v839 = vmul.f32 %v796, %v809
    %v840 = vmul.f32 %v800, %v809
    %v841 = vmul.f32 %v804, %v809
    %v842 = vadd.f32 %v646, %v810
    %v843 = vadd.f32 %v647, %v811
    %v844 = vadd.f32 %v648, %v812
    %v845 = vadd.f32 %v649, %v813
    %v846 = vadd.f32 %v650, %v814
    %v847 = vadd.f32 %v651, %v815
    %v848 = vadd.f32 %v652, %v816
    %v849 = vadd.f32 %v653, %v817
    %v850 = vadd.f32 %v654, %v818
    %v851 = vadd.f32 %v655, %v819
    %v852 = vadd.f32 %v656, %v820
    %v853 = vadd.f32 %v657, %v821
    %v854 = vadd.f32 %v658, %v822
    %v855 = vadd.f32 %v659, %v823
    %v856 = vadd.f32 %v660, %v824
    %v857 = vadd.f32 %v661, %v825
    %v858 = vadd.f32 %v662, %v826
    %v859 = vadd.f32 %v663, %v827
    %v860 = vadd.f32 %v664, %v828
    %v861 = vadd.f32 %v665, %v829
    %v862 = vadd.f32 %v666, %v830
    %v863 = vadd.f32 %v667, %v831
    %v864 = vadd.f32 %v668, %v832
    %v865 = vadd.f32 %v669, %v833
    %v866 = vadd.f32 %v670, %v834
    %v867 = vadd.f32 %v671, %v835
    %v868 = vadd.f32 %v672, %v836
    %v869 = vadd.f32 %v673, %v837
    %v870 = vadd.f32 %v674, %v838
    %v871 = vadd.f32 %v675, %v839
    %v872 = vadd.f32 %v676, %v840
    %v873 = vadd.f32 %v677, %v841
    %874 = vset.pattern.permute.xlu0 3
    %875 = vperm.xlu0 %874, %v30
    %v876 = vpop.permute.xlu0 %875
    %878 = vset.pattern.permute.xlu0 3
    %879 = vperm.xlu0 %878, %v31
    %v880 = vpop.permute.xlu0 %879
    %882 = vset.pattern.permute.xlu0 3
    %883 = vperm.xlu0 %882, %v32
    %v884 = vpop.permute.xlu0 %883
    %886 = vset.pattern.permute.xlu0 3
    %887 = vperm.xlu0 %886, %v33
    %v888 = vpop.permute.xlu0 %887
    %890 = vset.pattern.permute.xlu0 3
    %891 = vperm.xlu0 %890, %v34
    %v892 = vpop.permute.xlu0 %891
    %894 = vset.pattern.permute.xlu0 3
    %895 = vperm.xlu0 %894, %v35
    %v896 = vpop.permute.xlu0 %895
    %898 = vset.pattern.permute.xlu0 3
    %899 = vperm.xlu0 %898, %v36
    %v900 = vpop.permute.xlu0 %899
    %902 = vset.pattern.permute.xlu0 3
    %903 = vperm.xlu0 %902, %v37
    %v904 = vpop.permute.xlu0 %903
    %906 = vset.pattern.permute.xlu0 3
    %907 = vperm.xlu0 %906, %v38
    %v908 = vpop.permute.xlu0 %907
    %910 = vset.pattern.permute.xlu0 3
    %911 = vperm.xlu0 %910, %v39
    %v912 = vpop.permute.xlu0 %911
    %914 = vset.pattern.permute.xlu0 3
    %915 = vperm.xlu0 %914, %v40
    %v916 = vpop.permute.xlu0 %915
    %918 = vset.pattern.permute.xlu0 3
    %919 = vperm.xlu0 %918, %v41
    %v920 = vpop.permute.xlu0 %919
    %922 = vset.pattern.permute.xlu0 3
    %923 = vperm.xlu0 %922, %v42
    %v924 = vpop.permute.xlu0 %923
    %926 = vset.pattern.permute.xlu0 3
    %927 = vperm.xlu0 %926, %v43
    %v928 = vpop.permute.xlu0 %927
    %930 = vset.pattern.permute.xlu0 3
    %931 = vperm.xlu0 %930, %v44
    %v932 = vpop.permute.xlu0 %931
    %934 = vset.pattern.permute.xlu0 3
    %935 = vperm.xlu0 %934, %v45
    %v936 = vpop.permute.xlu0 %935
    %938 = vset.pattern.permute.xlu0 3
    %939 = vperm.xlu0 %938, %v46
    %v940 = vpop.permute.xlu0 %939
    %942 = vset.pattern.permute.xlu0 3
    %943 = vperm.xlu0 %942, %v47
    %v944 = vpop.permute.xlu0 %943
    %946 = vset.pattern.permute.xlu0 3
    %947 = vperm.xlu0 %946, %v48
    %v948 = vpop.permute.xlu0 %947
    %950 = vset.pattern.permute.xlu0 3
    %951 = vperm.xlu0 %950, %v49
    %v952 = vpop.permute.xlu0 %951
    %954 = vset.pattern.permute.xlu0 3
    %955 = vperm.xlu0 %954, %v50
    %v956 = vpop.permute.xlu0 %955
    %958 = vset.pattern.permute.xlu0 3
    %959 = vperm.xlu0 %958, %v51
    %v960 = vpop.permute.xlu0 %959
    %962 = vset.pattern.permute.xlu0 3
    %963 = vperm.xlu0 %962, %v52
    %v964 = vpop.permute.xlu0 %963
    %966 = vset.pattern.permute.xlu0 3
    %967 = vperm.xlu0 %966, %v53
    %v968 = vpop.permute.xlu0 %967
    %970 = vset.pattern.permute.xlu0 3
    %971 = vperm.xlu0 %970, %v54
    %v972 = vpop.permute.xlu0 %971
    %974 = vset.pattern.permute.xlu0 3
    %975 = vperm.xlu0 %974, %v55
    %v976 = vpop.permute.xlu0 %975
    %978 = vset.pattern.permute.xlu0 3
    %979 = vperm.xlu0 %978, %v56
    %v980 = vpop.permute.xlu0 %979
    %982 = vset.pattern.permute.xlu0 3
    %983 = vperm.xlu0 %982, %v57
    %v984 = vpop.permute.xlu0 %983
    %986 = vset.pattern.permute.xlu0 3
    %987 = vperm.xlu0 %986, %v58
    %v988 = vpop.permute.xlu0 %987
    %990 = vset.pattern.permute.xlu0 3
    %991 = vperm.xlu0 %990, %v59
    %v992 = vpop.permute.xlu0 %991
    %994 = vset.pattern.permute.xlu0 3
    %995 = vperm.xlu0 %994, %v60
    %v996 = vpop.permute.xlu0 %995
    %998 = vset.pattern.permute.xlu0 3
    %999 = vperm.xlu0 %998, %v61
    %v1000 = vpop.permute.xlu0 %999
    %v1002 = vlaneseq
    %v1003 = vshrl.u32 %v1002, 7
    %v1004 = vsub.s32 3, %v1003
    %v1005 = vrot.slane %v29, %v1004
    %v1006 = vmul.f32 %v876, %v1005
    %v1007 = vmul.f32 %v880, %v1005
    %v1008 = vmul.f32 %v884, %v1005
    %v1009 = vmul.f32 %v888, %v1005
    %v1010 = vmul.f32 %v892, %v1005
    %v1011 = vmul.f32 %v896, %v1005
    %v1012 = vmul.f32 %v900, %v1005
    %v1013 = vmul.f32 %v904, %v1005
    %v1014 = vmul.f32 %v908, %v1005
    %v1015 = vmul.f32 %v912, %v1005
    %v1016 = vmul.f32 %v916, %v1005
    %v1017 = vmul.f32 %v920, %v1005
    %v1018 = vmul.f32 %v924, %v1005
    %v1019 = vmul.f32 %v928, %v1005
    %v1020 = vmul.f32 %v932, %v1005
    %v1021 = vmul.f32 %v936, %v1005
    %v1022 = vmul.f32 %v940, %v1005
    %v1023 = vmul.f32 %v944, %v1005
    %v1024 = vmul.f32 %v948, %v1005
    %v1025 = vmul.f32 %v952, %v1005
    %v1026 = vmul.f32 %v956, %v1005
    %v1027 = vmul.f32 %v960, %v1005
    %v1028 = vmul.f32 %v964, %v1005
    %v1029 = vmul.f32 %v968, %v1005
    %v1030 = vmul.f32 %v972, %v1005
    %v1031 = vmul.f32 %v976, %v1005
    %v1032 = vmul.f32 %v980, %v1005
    %v1033 = vmul.f32 %v984, %v1005
    %v1034 = vmul.f32 %v988, %v1005
    %v1035 = vmul.f32 %v992, %v1005
    %v1036 = vmul.f32 %v996, %v1005
    %v1037 = vmul.f32 %v1000, %v1005
    %v1038 = vadd.f32 %v842, %v1006
    %v1039 = vadd.f32 %v843, %v1007
    %v1040 = vadd.f32 %v844, %v1008
    %v1041 = vadd.f32 %v845, %v1009
    %v1042 = vadd.f32 %v846, %v1010
    %v1043 = vadd.f32 %v847, %v1011
    %v1044 = vadd.f32 %v848, %v1012
    %v1045 = vadd.f32 %v849, %v1013
    %v1046 = vadd.f32 %v850, %v1014
    %v1047 = vadd.f32 %v851, %v1015
    %v1048 = vadd.f32 %v852, %v1016
    %v1049 = vadd.f32 %v853, %v1017
    %v1050 = vadd.f32 %v854, %v1018
    %v1051 = vadd.f32 %v855, %v1019
    %v1052 = vadd.f32 %v856, %v1020
    %v1053 = vadd.f32 %v857, %v1021
    %v1054 = vadd.f32 %v858, %v1022
    %v1055 = vadd.f32 %v859, %v1023
    %v1056 = vadd.f32 %v860, %v1024
    %v1057 = vadd.f32 %v861, %v1025
    %v1058 = vadd.f32 %v862, %v1026
    %v1059 = vadd.f32 %v863, %v1027
    %v1060 = vadd.f32 %v864, %v1028
    %v1061 = vadd.f32 %v865, %v1029
    %v1062 = vadd.f32 %v866, %v1030
    %v1063 = vadd.f32 %v867, %v1031
    %v1064 = vadd.f32 %v868, %v1032
    %v1065 = vadd.f32 %v869, %v1033
    %v1066 = vadd.f32 %v870, %v1034
    %v1067 = vadd.f32 %v871, %v1035
    %v1068 = vadd.f32 %v872, %v1036
    %v1069 = vadd.f32 %v873, %v1037
    %v1070 = vmax.f32 %v1038, 0.0
    %v1071 = vmax.f32 %v1039, 0.0
    %v1072 = vmax.f32 %v1040, 0.0
    %v1073 = vmax.f32 %v1041, 0.0
    %v1074 = vmax.f32 %v1042, 0.0
    %v1075 = vmax.f32 %v1043, 0.0
    %v1076 = vmax.f32 %v1044, 0.0
    %v1077 = vmax.f32 %v1045, 0.0
    %v1078 = vmax.f32 %v1046, 0.0
    %v1079 = vmax.f32 %v1047, 0.0
    %v1080 = vmax.f32 %v1048, 0.0
    %v1081 = vmax.f32 %v1049, 0.0
    %v1082 = vmax.f32 %v1050, 0.0
    %v1083 = vmax.f32 %v1051, 0.0
    %v1084 = vmax.f32 %v1052, 0.0
    %v1085 = vmax.f32 %v1053, 0.0
    %v1086 = vmax.f32 %v1054, 0.0
    %v1087 = vmax.f32 %v1055, 0.0
    %v1088 = vmax.f32 %v1056, 0.0
    %v1089 = vmax.f32 %v1057, 0.0
    %v1090 = vmax.f32 %v1058, 0.0
    %v1091 = vmax.f32 %v1059, 0.0
    %v1092 = vmax.f32 %v1060, 0.0
    %v1093 = vmax.f32 %v1061, 0.0
    %v1094 = vmax.f32 %v1062, 0.0
    %v1095 = vmax.f32 %v1063, 0.0
    %v1096 = vmax.f32 %v1064, 0.0
    %v1097 = vmax.f32 %v1065, 0.0
    %v1098 = vmax.f32 %v1066, 0.0
    %v1099 = vmax.f32 %v1067, 0.0
    %v1100 = vmax.f32 %v1068, 0.0
    %v1101 = vmax.f32 %v1069, 0.0
    %v1102 = vpack.c.bf16 %v1071, %v1070
    %v1103 = vpack.c.bf16 %v1073, %v1072
    %v1104 = vpack.c.bf16 %v1075, %v1074
    %v1105 = vpack.c.bf16 %v1077, %v1076
    %v1106 = vpack.c.bf16 %v1079, %v1078
    %v1107 = vpack.c.bf16 %v1081, %v1080
    %v1108 = vpack.c.bf16 %v1083, %v1082
    %v1109 = vpack.c.bf16 %v1085, %v1084
    %v1110 = vpack.c.bf16 %v1087, %v1086
    %v1111 = vpack.c.bf16 %v1089, %v1088
    %v1112 = vpack.c.bf16 %v1091, %v1090
    %v1113 = vpack.c.bf16 %v1093, %v1092
    %v1114 = vpack.c.bf16 %v1095, %v1094
    %v1115 = vpack.c.bf16 %v1097, %v1096
    %v1116 = vpack.c.bf16 %v1099, %v1098
    %v1117 = vpack.c.bf16 %v1101, %v1100
    %v1118 = vld [vmem:[%s3] sm:$0xff]
    %v1119 = vld [vmem:[%s3 + $0x8] sm:$0xff]
    %v1120 = vld [vmem:[%s3 + $0x10] sm:$0xff]
    %v1121 = vld [vmem:[%s3 + $0x18] sm:$0xff]
    %v1122 = vld [vmem:[%s3 + $0x20] sm:$0xff]
    %v1123 = vld [vmem:[%s3 + $0x28] sm:$0xff]
    %v1124 = vld [vmem:[%s3 + $0x30] sm:$0xff]
    %v1125 = vld [vmem:[%s3 + $0x38] sm:$0xff]
    %v1126 = vld [vmem:[%s3 + $0x40] sm:$0xff]
    %v1127 = vld [vmem:[%s3 + $0x48] sm:$0xff]
    %v1128 = vld [vmem:[%s3 + $0x50] sm:$0xff]
    %v1129 = vld [vmem:[%s3 + $0x58] sm:$0xff]
    %v1130 = vld [vmem:[%s3 + $0x60] sm:$0xff]
    %v1131 = vld [vmem:[%s3 + $0x68] sm:$0xff]
    %v1132 = vld [vmem:[%s3 + $0x70] sm:$0xff]
    %v1133 = vld [vmem:[%s3 + $0x78] sm:$0xff]
    %v1134 = vld [vmem:[%s4] sm:$0xff]
    %v1135 = vld [vmem:[%s4 + $0x8] sm:$0xff]
    %v1136 = vld [vmem:[%s4 + $0x10] sm:$0xff]
    %v1137 = vld [vmem:[%s4 + $0x18] sm:$0xff]
    %v1138 = vld [vmem:[%s4 + $0x20] sm:$0xff]
    %v1139 = vld [vmem:[%s4 + $0x28] sm:$0xff]
    %v1140 = vld [vmem:[%s4 + $0x30] sm:$0xff]
    %v1141 = vld [vmem:[%s4 + $0x38] sm:$0xff]
    %v1142 = vld [vmem:[%s4 + $0x40] sm:$0xff]
    %v1143 = vld [vmem:[%s4 + $0x48] sm:$0xff]
    %v1144 = vld [vmem:[%s4 + $0x50] sm:$0xff]
    %v1145 = vld [vmem:[%s4 + $0x58] sm:$0xff]
    %v1146 = vld [vmem:[%s4 + $0x60] sm:$0xff]
    %v1147 = vld [vmem:[%s4 + $0x68] sm:$0xff]
    %v1148 = vld [vmem:[%s4 + $0x70] sm:$0xff]
    %v1149 = vld [vmem:[%s4 + $0x78] sm:$0xff]
    %1151 = vset.pattern.permute.xlu0 0
    %1152 = vperm.xlu0 %1151, %v1134
    %v1153 = vpop.permute.xlu0 %1152
    %1156 = vset.pattern.permute.xlu0 0
    %1157 = vperm.xlu0 %1156, %v1135
    %v1158 = vpop.permute.xlu0 %1157
    %1161 = vset.pattern.permute.xlu0 0
    %1162 = vperm.xlu0 %1161, %v1136
    %v1163 = vpop.permute.xlu0 %1162
    %1166 = vset.pattern.permute.xlu0 0
    %1167 = vperm.xlu0 %1166, %v1137
    %v1168 = vpop.permute.xlu0 %1167
    %1171 = vset.pattern.permute.xlu0 0
    %1172 = vperm.xlu0 %1171, %v1138
    %v1173 = vpop.permute.xlu0 %1172
    %1176 = vset.pattern.permute.xlu0 0
    %1177 = vperm.xlu0 %1176, %v1139
    %v1178 = vpop.permute.xlu0 %1177
    %1181 = vset.pattern.permute.xlu0 0
    %1182 = vperm.xlu0 %1181, %v1140
    %v1183 = vpop.permute.xlu0 %1182
    %1186 = vset.pattern.permute.xlu0 0
    %1187 = vperm.xlu0 %1186, %v1141
    %v1188 = vpop.permute.xlu0 %1187
    %1191 = vset.pattern.permute.xlu0 0
    %1192 = vperm.xlu0 %1191, %v1142
    %v1193 = vpop.permute.xlu0 %1192
    %1196 = vset.pattern.permute.xlu0 0
    %1197 = vperm.xlu0 %1196, %v1143
    %v1198 = vpop.permute.xlu0 %1197
    %1201 = vset.pattern.permute.xlu0 0
    %1202 = vperm.xlu0 %1201, %v1144
    %v1203 = vpop.permute.xlu0 %1202
    %1206 = vset.pattern.permute.xlu0 0
    %1207 = vperm.xlu0 %1206, %v1145
    %v1208 = vpop.permute.xlu0 %1207
    %1211 = vset.pattern.permute.xlu0 0
    %1212 = vperm.xlu0 %1211, %v1146
    %v1213 = vpop.permute.xlu0 %1212
    %1216 = vset.pattern.permute.xlu0 0
    %1217 = vperm.xlu0 %1216, %v1147
    %v1218 = vpop.permute.xlu0 %1217
    %1221 = vset.pattern.permute.xlu0 0
    %1222 = vperm.xlu0 %1221, %v1148
    %v1223 = vpop.permute.xlu0 %1222
    %1226 = vset.pattern.permute.xlu0 0
    %1227 = vperm.xlu0 %1226, %v1149
    %v1228 = vpop.permute.xlu0 %1227
    %v1246 = vunpack.c.l.b16 %v1118
    %v1247 = vunpack.c.h.b16 %v1118
    %v1248 = vunpack.c.l.b16 %v1119
    %v1249 = vunpack.c.h.b16 %v1119
    %v1250 = vunpack.c.l.b16 %v1120
    %v1251 = vunpack.c.h.b16 %v1120
    %v1252 = vunpack.c.l.b16 %v1121
    %v1253 = vunpack.c.h.b16 %v1121
    %v1254 = vunpack.c.l.b16 %v1122
    %v1255 = vunpack.c.h.b16 %v1122
    %v1256 = vunpack.c.l.b16 %v1123
    %v1257 = vunpack.c.h.b16 %v1123
    %v1258 = vunpack.c.l.b16 %v1124
    %v1259 = vunpack.c.h.b16 %v1124
    %v1260 = vunpack.c.l.b16 %v1125
    %v1261 = vunpack.c.h.b16 %v1125
    %v1262 = vunpack.c.l.b16 %v1126
    %v1263 = vunpack.c.h.b16 %v1126
    %v1264 = vunpack.c.l.b16 %v1127
    %v1265 = vunpack.c.h.b16 %v1127
    %v1266 = vunpack.c.l.b16 %v1128
    %v1267 = vunpack.c.h.b16 %v1128
    %v1268 = vunpack.c.l.b16 %v1129
    %v1269 = vunpack.c.h.b16 %v1129
    %v1270 = vunpack.c.l.b16 %v1130
    %v1271 = vunpack.c.h.b16 %v1130
    %v1272 = vunpack.c.l.b16 %v1131
    %v1273 = vunpack.c.h.b16 %v1131
    %v1274 = vunpack.c.l.b16 %v1132
    %v1275 = vunpack.c.h.b16 %v1132
    %v1276 = vunpack.c.l.b16 %v1133
    %v1277 = vunpack.c.h.b16 %v1133
    %v1278 = vpack.c.b16 %v1248, %v1246
    %v1279 = vpack.c.b16 %v1249, %v1247
    %v1280 = vpack.c.b16 %v1252, %v1250
    %v1281 = vpack.c.b16 %v1253, %v1251
    %v1282 = vpack.c.b16 %v1256, %v1254
    %v1283 = vpack.c.b16 %v1257, %v1255
    %v1284 = vpack.c.b16 %v1260, %v1258
    %v1285 = vpack.c.b16 %v1261, %v1259
    %v1286 = vpack.c.b16 %v1264, %v1262
    %v1287 = vpack.c.b16 %v1265, %v1263
    %v1288 = vpack.c.b16 %v1268, %v1266
    %v1289 = vpack.c.b16 %v1269, %v1267
    %v1290 = vpack.c.b16 %v1272, %v1270
    %v1291 = vpack.c.b16 %v1273, %v1271
    %v1292 = vpack.c.b16 %v1276, %v1274
    %v1293 = vpack.c.b16 %v1277, %v1275
    %1310 = vmatprep.subr.bf16.mxu0 0
    %1311 = vmatpush1.bf16.msra.mxu0 %v1109
    %1312 = vmatprep.subr.bf16.mxu0 0
    %1313 = vmatpush1.bf16.msra.mxu0 %v1108
    %1314 = vmatprep.subr.bf16.mxu0 0
    %1315 = vmatpush1.bf16.msra.mxu0 %v1107
    %1316 = vmatprep.subr.bf16.mxu0 0
    %1317 = vmatpush1.bf16.msra.mxu0 %v1106
    %1318 = vmatprep.subr.bf16.mxu0 0
    %1319 = vmatpush1.bf16.msra.mxu0 %v1105
    %1320 = vmatprep.subr.bf16.mxu0 0
    %1321 = vmatpush1.bf16.msra.mxu0 %v1104
    %1322 = vmatprep.subr.bf16.mxu0 0
    %1323 = vmatpush1.bf16.msra.mxu0 %v1103
    %1324 = vmatprep.subr.bf16.mxu0 0
    %1325 = vmatpush1.bf16.msra.mxu0 %v1102
    %1326 = vmatprep.subr.bf16.mxu0 0
    %1327 = vmatpush2.bf16.msra.mxu0 %v1117
    %1328 = vmatprep.subr.bf16.mxu0 0
    %1329 = vmatpush2.bf16.msra.mxu0 %v1116
    %1330 = vmatprep.subr.bf16.mxu0 0
    %1331 = vmatpush2.bf16.msra.mxu0 %v1115
    %1332 = vmatprep.subr.bf16.mxu0 0
    %1333 = vmatpush2.bf16.msra.mxu0 %v1114
    %1334 = vmatprep.subr.bf16.mxu0 0
    %1335 = vmatpush2.bf16.msra.mxu0 %v1113
    %1336 = vmatprep.subr.bf16.mxu0 0
    %1337 = vmatpush2.bf16.msra.mxu0 %v1112
    %1338 = vmatprep.subr.bf16.mxu0 0
    %1339 = vmatpush2.bf16.msra.mxu0 %v1111
    %1340 = vmatprep.subr.bf16.mxu0 0
    %1341 = vmatpush2.bf16.msra.mxu0 %v1110
    %1342 = vmatprep.mubr.bf16.mxu0 %v1279
    %1343 = vmatmul.mubr.bf16.gmra.mxu0 %v1278
    %v1344 = vpop.f32.mrf.mxu0
    %v1345 = vadd.f32 %v1153, %v1344
    %v1346 = vpop.f32.mrf.mxu0
    %v1347 = vpop.f32.mrf.mxu0
    %v1348 = vadd.f32 %v1158, %v1347
    %v1349 = vpop.f32.mrf.mxu0
    %1350 = vmatprep.mubr.bf16.mxu0 %v1281
    %1351 = vmatmul.mubr.bf16.gmra.mxu0 %v1280
    %v1352 = vpop.f32.mrf.mxu0
    %v1353 = vadd.f32 %v1163, %v1352
    %v1354 = vpop.f32.mrf.mxu0
    %v1355 = vpop.f32.mrf.mxu0
    %v1356 = vadd.f32 %v1168, %v1355
    %v1357 = vpop.f32.mrf.mxu0
    %1358 = vmatprep.mubr.bf16.mxu0 %v1283
    %1359 = vmatmul.mubr.bf16.gmra.mxu0 %v1282
    %v1360 = vpop.f32.mrf.mxu0
    %v1361 = vadd.f32 %v1173, %v1360
    %v1362 = vpop.f32.mrf.mxu0
    %v1363 = vpop.f32.mrf.mxu0
    %v1364 = vadd.f32 %v1178, %v1363
    %v1365 = vpop.f32.mrf.mxu0
    %1366 = vmatprep.mubr.bf16.mxu0 %v1285
    %1367 = vmatmul.mubr.bf16.gmra.mxu0 %v1284
    %v1368 = vpop.f32.mrf.mxu0
    %v1369 = vadd.f32 %v1183, %v1368
    %v1370 = vpop.f32.mrf.mxu0
    %v1371 = vpop.f32.mrf.mxu0
    %v1372 = vadd.f32 %v1188, %v1371
    %v1373 = vpop.f32.mrf.mxu0
    %1374 = vmatprep.mubr.bf16.mxu0 %v1287
    %1375 = vmatmul.mubr.bf16.gmra.mxu0 %v1286
    %v1376 = vpop.f32.mrf.mxu0
    %v1377 = vadd.f32 %v1193, %v1376
    %v1378 = vpop.f32.mrf.mxu0
    %v1379 = vpop.f32.mrf.mxu0
    %v1380 = vadd.f32 %v1198, %v1379
    %v1381 = vpop.f32.mrf.mxu0
    %1382 = vmatprep.mubr.bf16.mxu0 %v1289
    %1383 = vmatmul.mubr.bf16.gmra.mxu0 %v1288
    %v1384 = vpop.f32.mrf.mxu0
    %v1385 = vadd.f32 %v1203, %v1384
    %v1386 = vpop.f32.mrf.mxu0
    %v1387 = vpop.f32.mrf.mxu0
    %v1388 = vadd.f32 %v1208, %v1387
    %v1389 = vpop.f32.mrf.mxu0
    %1390 = vmatprep.mubr.bf16.mxu0 %v1291
    %1391 = vmatmul.mubr.bf16.gmra.mxu0 %v1290
    %v1392 = vpop.f32.mrf.mxu0
    %v1393 = vadd.f32 %v1213, %v1392
    %v1394 = vpop.f32.mrf.mxu0
    %v1395 = vpop.f32.mrf.mxu0
    %v1396 = vadd.f32 %v1218, %v1395
    %v1397 = vpop.f32.mrf.mxu0
    %1398 = vmatprep.mubr.bf16.mxu0 %v1293
    %1399 = vmatmul.mubr.bf16.gmra.mxu0 %v1292
    %v1400 = vpop.f32.mrf.mxu0
    %v1401 = vadd.f32 %v1223, %v1400
    %v1402 = vpop.f32.mrf.mxu0
    %v1403 = vpop.f32.mrf.mxu0
    %v1404 = vadd.f32 %v1228, %v1403
    %v1405 = vpop.f32.mrf.mxu0
    %1406 = vdwg.mxu0
    %v1407 = vmax.f32 %v1345, 0.0
    %v1408 = vmax.f32 %v1348, 0.0
    %v1409 = vmax.f32 %v1353, 0.0
    %v1410 = vmax.f32 %v1356, 0.0
    %v1411 = vmax.f32 %v1361, 0.0
    %v1412 = vmax.f32 %v1364, 0.0
    %v1413 = vmax.f32 %v1369, 0.0
    %v1414 = vmax.f32 %v1372, 0.0
    %v1415 = vmax.f32 %v1377, 0.0
    %v1416 = vmax.f32 %v1380, 0.0
    %v1417 = vmax.f32 %v1385, 0.0
    %v1418 = vmax.f32 %v1388, 0.0
    %v1419 = vmax.f32 %v1393, 0.0
    %v1420 = vmax.f32 %v1396, 0.0
    %v1421 = vmax.f32 %v1401, 0.0
    %v1422 = vmax.f32 %v1404, 0.0
    %v1423 = vld [vmem:[%s5] sm:$0xff]
    %v1424 = vld [vmem:[%s5 + $0x8] sm:$0xff]
    %v1425 = vld [vmem:[%s5 + $0x10] sm:$0xff]
    %v1426 = vld [vmem:[%s5 + $0x18] sm:$0xff]
    %v1427 = vld [vmem:[%s5 + $0x20] sm:$0xff]
    %v1428 = vld [vmem:[%s5 + $0x28] sm:$0xff]
    %v1429 = vld [vmem:[%s5 + $0x30] sm:$0xff]
    %v1430 = vld [vmem:[%s5 + $0x38] sm:$0xff]
    %v1431 = vld [vmem:[%s5 + $0x40] sm:$0xff]
    %v1432 = vld [vmem:[%s5 + $0x48] sm:$0xff]
    %v1433 = vld [vmem:[%s5 + $0x50] sm:$0xff]
    %v1434 = vld [vmem:[%s5 + $0x58] sm:$0xff]
    %v1435 = vld [vmem:[%s5 + $0x60] sm:$0xff]
    %v1436 = vld [vmem:[%s5 + $0x68] sm:$0xff]
    %v1437 = vld [vmem:[%s5 + $0x70] sm:$0xff]
    %v1438 = vld [vmem:[%s5 + $0x78] sm:$0xff]
    %1440 = vset.pattern.permute.xlu0 0
    %1441 = vperm.xlu0 %1440, %v1423
    %v1442 = vpop.permute.xlu0 %1441
    %1445 = vset.pattern.permute.xlu0 0
    %1446 = vperm.xlu0 %1445, %v1424
    %v1447 = vpop.permute.xlu0 %1446
    %1450 = vset.pattern.permute.xlu0 0
    %1451 = vperm.xlu0 %1450, %v1425
    %v1452 = vpop.permute.xlu0 %1451
    %1455 = vset.pattern.permute.xlu0 0
    %1456 = vperm.xlu0 %1455, %v1426
    %v1457 = vpop.permute.xlu0 %1456
    %1460 = vset.pattern.permute.xlu0 0
    %1461 = vperm.xlu0 %1460, %v1427
    %v1462 = vpop.permute.xlu0 %1461
    %1465 = vset.pattern.permute.xlu0 0
    %1466 = vperm.xlu0 %1465, %v1428
    %v1467 = vpop.permute.xlu0 %1466
    %1470 = vset.pattern.permute.xlu0 0
    %1471 = vperm.xlu0 %1470, %v1429
    %v1472 = vpop.permute.xlu0 %1471
    %1475 = vset.pattern.permute.xlu0 0
    %1476 = vperm.xlu0 %1475, %v1430
    %v1477 = vpop.permute.xlu0 %1476
    %1480 = vset.pattern.permute.xlu0 0
    %1481 = vperm.xlu0 %1480, %v1431
    %v1482 = vpop.permute.xlu0 %1481
    %1485 = vset.pattern.permute.xlu0 0
    %1486 = vperm.xlu0 %1485, %v1432
    %v1487 = vpop.permute.xlu0 %1486
    %1490 = vset.pattern.permute.xlu0 0
    %1491 = vperm.xlu0 %1490, %v1433
    %v1492 = vpop.permute.xlu0 %1491
    %1495 = vset.pattern.permute.xlu0 0
    %1496 = vperm.xlu0 %1495, %v1434
    %v1497 = vpop.permute.xlu0 %1496
    %1500 = vset.pattern.permute.xlu0 0
    %1501 = vperm.xlu0 %1500, %v1435
    %v1502 = vpop.permute.xlu0 %1501
    %1505 = vset.pattern.permute.xlu0 0
    %1506 = vperm.xlu0 %1505, %v1436
    %v1507 = vpop.permute.xlu0 %1506
    %1510 = vset.pattern.permute.xlu0 0
    %1511 = vperm.xlu0 %1510, %v1437
    %v1512 = vpop.permute.xlu0 %1511
    %1515 = vset.pattern.permute.xlu0 0
    %1516 = vperm.xlu0 %1515, %v1438
    %v1517 = vpop.permute.xlu0 %1516
    %v1519 = vmul.f32 %v1407, %v1442
    %v1520 = vmul.f32 %v1408, %v1447
    %v1521 = vmul.f32 %v1409, %v1452
    %v1522 = vmul.f32 %v1410, %v1457
    %v1523 = vmul.f32 %v1411, %v1462
    %v1524 = vmul.f32 %v1412, %v1467
    %v1525 = vmul.f32 %v1413, %v1472
    %v1526 = vmul.f32 %v1414, %v1477
    %v1527 = vmul.f32 %v1415, %v1482
    %v1528 = vmul.f32 %v1416, %v1487
    %v1529 = vmul.f32 %v1417, %v1492
    %v1530 = vmul.f32 %v1418, %v1497
    %v1531 = vmul.f32 %v1419, %v1502
    %v1532 = vmul.f32 %v1420, %v1507
    %v1533 = vmul.f32 %v1421, %v1512
    %v1534 = vmul.f32 %v1422, %v1517
    %v1535 = vadd.f32 %v1519, %v1520
    %v1536 = vadd.f32 %v1535, %v1521
    %v1537 = vadd.f32 %v1536, %v1522
    %v1538 = vadd.f32 %v1537, %v1523
    %v1539 = vadd.f32 %v1538, %v1524
    %v1540 = vadd.f32 %v1539, %v1525
    %v1541 = vadd.f32 %v1540, %v1526
    %v1542 = vadd.f32 %v1541, %v1527
    %v1543 = vadd.f32 %v1542, %v1528
    %v1544 = vadd.f32 %v1543, %v1529
    %v1545 = vadd.f32 %v1544, %v1530
    %v1546 = vadd.f32 %v1545, %v1531
    %v1547 = vadd.f32 %v1546, %v1532
    %v1548 = vadd.f32 %v1547, %v1533
    %v1549 = vadd.f32 %v1548, %v1534
    %v1550 = vrot.slane %v1549, 4
    %v1551 = vadd.f32 %v1549, %v1550
    %v1552 = vrot.slane %v1551, 2
    %v1553 = vadd.f32 %v1551, %v1552
    %v1554 = vrot.slane %v1553, 1
    %v1555 = vadd.f32 %v1553, %v1554
    %s1556 = sld [smem:[#allocation2]]
    %v1557 = vstv %s1556
    %v1558 = vadd.f32 %v1555, %v1557
    %1559 = vst [vmem:[#allocation3] sm:$0x1] %v1558
    // Predicated region
    $region30: #{tpu_custom_call.1} parent=1 // pred_check
      _
    $region31: #{tpu_custom_call.1} parent=1 // pred_check_branch
      %1561 = sbr.rel (0) target = $region33
    $region32: #{tpu_custom_call.1} parent=1 // pred_region
      %s1563 = ssub.s32 16, 16
      %1564 = vsyncadd [#allocation4], %s1563
      %s1566 = sshll.u32 [#allocation3], 4
      %s1567 = int_to_ptr.vmem [resolvable:$true] %s1566
      %1569 = dma.vmem_to_hbm [thread:$0]  %s1567, 16, %s7, [#allocation4]
    $region33: #{tpu_custom_call.1} parent=1 // pred_fallthru
      _
    // Predicated region
    $region34: #{tpu_custom_call.1} parent=1 // pred_check
      _
    $region35: #{tpu_custom_call.1} parent=1 // pred_check_branch
      %1571 = sbr.rel (0) target = $region37
    $region36: #{tpu_custom_call.1} parent=1 // pred_region
      %1572 = dma.done [#allocation4], 16
    $region37: #{tpu_custom_call.1} parent=1 // pred_fallthru
      _
    %1573 = vsyncpa [#allocation4], 1

</llo_original>
